<compile_context>
chip_gen: v5e
topology: v5e:2x2
jax: 0.10.0
libtpu: 0.0.40
codegen_flags: <defaults>
</compile_context>

<pallas_src>
import jax
import jax.numpy as jnp
from jax.experimental import pallas as pl
from jax.experimental.pallas import tpu as pltpu

NUM_BOND_TYPE = 6
NUM_BOND_DIRECTION = 3


def _round_up(v, m):
    return (v + m - 1) // m * m


# --------------------------- kernels ---------------------------------------

def encode_kernel(alpha_ref, x_ref, mask_ref, wenc_ref, h_ref):
    """h = mask * (PReLU(x) @ Wenc), written as bf16 for the aggregation stage."""
    alpha = alpha_ref[0]                                   # PReLU slope (SMEM scalar)
    x = x_ref[...]                                         # (tile, H_pad) f32
    a = jnp.where(x >= 0.0, x, alpha * x)                  # PReLU, f32 on VPU
    h = jnp.dot(a.astype(jnp.bfloat16), wenc_ref[...],
                preferred_element_type=jnp.float32)        # bf16 MXU, f32 accum
    h = jnp.where(mask_ref[...] > 0.0, h, 0.0)             # x[mask_node_indices] = 0
    h_ref[...] = h.astype(jnp.bfloat16)


def aggregate_kernel(a_ref, h_ref, eagg_ref, w1_ref, b1_ref, w2_ref, b2_ref,
                     out_ref, acc_ref):
    """aggr = A @ h + e_aggr ;  out = ReLU(aggr @ W1 + b1) @ W2 + b2."""
    k = pl.program_id(1)

    @pl.when(k == 0)
    def _():
        acc_ref[...] = eagg_ref[...]                       # init with edge-emb aggregate

    acc_ref[...] += jnp.dot(a_ref[...], h_ref[...],
                            preferred_element_type=jnp.float32)

    @pl.when(k == pl.num_programs(1) - 1)
    def _():
        hid = jnp.dot(acc_ref[...].astype(jnp.bfloat16), w1_ref[...],
                      preferred_element_type=jnp.float32) + b1_ref[...]
        hid = jnp.maximum(hid, 0.0)
        out_ref[...] = (jnp.dot(hid.astype(jnp.bfloat16), w2_ref[...],
                                preferred_element_type=jnp.float32)
                        + b2_ref[...])


# --------------------------- wrapper ----------------------------------------

def gnn_decoder_forward(params, x, edge_index, edge_attr, mask_node_indices):
    N, H = x.shape
    out_dim = params["w2"].shape[1]

    H_pad = _round_up(H, 128)
    H2_pad = _round_up(2 * H, 128)
    O_pad = _round_up(out_dim, 128)
    tile = min(256, _round_up(N, 8))
    N_pad = _round_up(N, tile)

    # ---- plain-JAX index glue: self-loops, edge embeddings, adjacency, mask ----
    loop = jnp.arange(N, dtype=edge_index.dtype)
    src = jnp.concatenate([edge_index[0], loop])
    dst = jnp.concatenate([edge_index[1], loop])
    bond_type = jnp.concatenate([edge_attr[:, 0],
                                 jnp.full((N,), 4, edge_attr.dtype)])   # self-loop type 4
    bond_dir = jnp.concatenate([edge_attr[:, 1],
                                jnp.zeros((N,), edge_attr.dtype)])
    eemb = (params["edge_emb1"][bond_type]
            + params["edge_emb2"][bond_dir]).astype(jnp.float32)
    e_aggr = jax.ops.segment_sum(eemb, dst, num_segments=N)             # (N, H)
    adj = jnp.zeros((N, N), jnp.float32).at[dst, src].add(1.0)          # A[i,j] = #edges j->i
    mask = jnp.ones((N,), jnp.float32).at[mask_node_indices].set(0.0)

    # ---- pad to MXU / lane-friendly shapes (zero padding is an exact no-op) ----
    xp = jnp.zeros((N_pad, H_pad), jnp.float32).at[:N, :H].set(x)
    maskp = jnp.ones((N_pad, 1), jnp.float32).at[:N, 0].set(mask)
    adjp = jnp.zeros((N_pad, N_pad), jnp.bfloat16).at[:N, :N].set(
        adj.astype(jnp.bfloat16))                                       # 0/1/counts exact in bf16
    eaggp = jnp.zeros((N_pad, H_pad), jnp.float32).at[:N, :H].set(e_aggr)
    wencp = jnp.zeros((H_pad, H_pad), jnp.bfloat16).at[:H, :H].set(
        params["wenc"].astype(jnp.bfloat16))
    w1p = jnp.zeros((H_pad, H2_pad), jnp.bfloat16).at[:H, :2 * H].set(
        params["w1"].astype(jnp.bfloat16))
    b1p = jnp.zeros((1, H2_pad), jnp.float32).at[:, :2 * H].set(params["b1"])
    w2p = jnp.zeros((H2_pad, O_pad), jnp.bfloat16).at[:2 * H, :out_dim].set(
        params["w2"].astype(jnp.bfloat16))
    b2p = jnp.zeros((1, O_pad), jnp.float32).at[:, :out_dim].set(params["b2"])
    alpha = params["prelu_alpha"].reshape(1).astype(jnp.float32)

    gm = N_pad // tile   # node-row tiles (parallel)
    gk = N_pad // tile   # reduction tiles over A's columns (arbitrary)

    # ---- stage 1: h = mask * (PReLU(x) @ Wenc) ----
    enc_cost = pl.CostEstimate(
        flops=2 * N_pad * H_pad * H_pad,
        transcendentals=0,
        bytes_accessed=(xp.size * 4 + wencp.size * 2 + maskp.size * 4
                        + N_pad * H_pad * 2))
    h = pl.pallas_call(
        encode_kernel,
        out_shape=jax.ShapeDtypeStruct((N_pad, H_pad), jnp.bfloat16),
        grid_spec=pltpu.PrefetchScalarGridSpec(
            num_scalar_prefetch=0,
            grid=(gm,),
            in_specs=[
                pl.BlockSpec(memory_space=pltpu.MemorySpace.SMEM),       # alpha
                pl.BlockSpec((tile, H_pad), lambda i: (i, 0)),           # x
                pl.BlockSpec((tile, 1), lambda i: (i, 0)),               # mask
                pl.BlockSpec((H_pad, H_pad), lambda i: (0, 0)),          # Wenc
            ],
            out_specs=pl.BlockSpec((tile, H_pad), lambda i: (i, 0)),
        ),
        compiler_params=pltpu.CompilerParams(
            dimension_semantics=("parallel",),
            vmem_limit_bytes=32 * 1024 * 1024),
        cost_estimate=enc_cost,
    )(alpha, xp, maskp, wencp)

    # ---- stage 2: out = MLP(A @ h + e_aggr) ----
    agg_cost = pl.CostEstimate(
        flops=(2 * N_pad * N_pad * H_pad
               + 2 * N_pad * H_pad * H2_pad
               + 2 * N_pad * H2_pad * O_pad),
        transcendentals=0,
        bytes_accessed=(adjp.size * 2 + N_pad * H_pad * 2 + eaggp.size * 4
                        + w1p.size * 2 + b1p.size * 4 + w2p.size * 2
                        + b2p.size * 4 + N_pad * O_pad * 4))
    out = pl.pallas_call(
        aggregate_kernel,
        out_shape=jax.ShapeDtypeStruct((N_pad, O_pad), jnp.float32),
        grid_spec=pltpu.PrefetchScalarGridSpec(
            num_scalar_prefetch=0,
            grid=(gm, gk),
            in_specs=[
                pl.BlockSpec((tile, tile), lambda i, k: (i, k)),         # A tile
                pl.BlockSpec((tile, H_pad), lambda i, k: (k, 0)),        # h tile
                pl.BlockSpec((tile, H_pad), lambda i, k: (i, 0)),        # e_aggr
                pl.BlockSpec((H_pad, H2_pad), lambda i, k: (0, 0)),      # W1
                pl.BlockSpec((1, H2_pad), lambda i, k: (0, 0)),          # b1
                pl.BlockSpec((H2_pad, O_pad), lambda i, k: (0, 0)),      # W2
                pl.BlockSpec((1, O_pad), lambda i, k: (0, 0)),           # b2
            ],
            out_specs=pl.BlockSpec((tile, O_pad), lambda i, k: (i, 0)),
            scratch_shapes=[pltpu.VMEM((tile, H_pad), jnp.float32)],
        ),
        compiler_params=pltpu.CompilerParams(
            dimension_semantics=("parallel", "arbitrary"),
            vmem_limit_bytes=32 * 1024 * 1024),
        cost_estimate=agg_cost,
    )(adjp, h, eaggp, w1p, b1p, w2p, b2p)

    return out[:N, :out_dim]


# --------------------------- pure-JAX reference ------------------------------

def gnn_decoder_reference(params, x, edge_index, edge_attr, mask_node_indices):
    """Pure-f32 JAX reference mirroring the PyTorch forward."""
    N, _ = x.shape
    loop = jnp.arange(N, dtype=edge_index.dtype)
    src = jnp.concatenate([edge_index[0], loop])
    dst = jnp.concatenate([edge_index[1], loop])
    bond_type = jnp.concatenate([edge_attr[:, 0], jnp.full((N,), 4, edge_attr.dtype)])
    bond_dir = jnp.concatenate([edge_attr[:, 1], jnp.zeros((N,), edge_attr.dtype)])
    eemb = (params["edge_emb1"][bond_type]
            + params["edge_emb2"][bond_dir]).astype(jnp.float32)
    alpha = params["prelu_alpha"][0]
    h = jnp.where(x >= 0.0, x, alpha * x)
    h = h @ params["wenc"]
    h = h.at[mask_node_indices].set(0.0)
    msg = h[src] + eemb
    aggr = jax.ops.segment_sum(msg, dst, num_segments=N)
    hid = jnp.maximum(aggr @ params["w1"] + params["b1"], 0.0)
    return hid @ params["w2"] + params["b2"]


def init_params(key, hidden_dim, out_dim):
    ks = jax.random.split(key, 6)
    s = lambda fan_in: 1.0 / jnp.sqrt(fan_in)
    return {
        # enc_to_dec: Linear(H, H, bias=False); stored pre-transposed (x @ W)
        "wenc": jax.random.normal(ks[0], (hidden_dim, hidden_dim), jnp.float32) * s(hidden_dim),
        # GIN mlp: Linear(H, 2H) -> ReLU -> Linear(2H, out_dim)
        "w1": jax.random.normal(ks[1], (hidden_dim, 2 * hidden_dim), jnp.float32) * s(hidden_dim),
        "b1": jnp.zeros((1, 2 * hidden_dim), jnp.float32),
        "w2": jax.random.normal(ks[2], (2 * hidden_dim, out_dim), jnp.float32) * s(2 * hidden_dim),
        "b2": jnp.zeros((1, out_dim), jnp.float32),
        # edge embedding tables
        "edge_emb1": jax.random.normal(ks[3], (NUM_BOND_TYPE, hidden_dim), jnp.float32) * 0.1,
        "edge_emb2": jax.random.normal(ks[4], (NUM_BOND_DIRECTION, hidden_dim), jnp.float32) * 0.1,
        # PReLU default init
        "prelu_alpha": jnp.array([0.25], jnp.float32),
        # dec_token exists in the module but is unused by forward() for gin.
    }


if __name__ == "__main__":
    key = jax.random.PRNGKey(0)
    k_par, k_x, k_ei, k_e1, k_e2 = jax.random.split(key, 5)

    N, H, OUT, E = 8, 32, 16, 12
    params = init_params(k_par, H, OUT)

    x = jax.random.normal(k_x, (N, H), jnp.float32)
    edge_index = jax.random.randint(k_ei, (2, E), 0, N, dtype=jnp.int32)
    edge_attr = jnp.stack(
        [jax.random.randint(k_e1, (E,), 0, NUM_BOND_TYPE, dtype=jnp.int32),
         jax.random.randint(k_e2, (E,), 0, NUM_BOND_DIRECTION, dtype=jnp.int32)],
        axis=1)
    mask_node_indices = jnp.array([1, 4, 6], dtype=jnp.int32)

    out = gnn_decoder_forward(params, x, edge_index, edge_attr, mask_node_indices)
    out = jax.block_until_ready(out)

    ref = gnn_decoder_reference(params, x, edge_index, edge_attr, mask_node_indices)
    assert out.shape == (N, OUT)
    # bf16 MXU inputs (f32 accumulation) vs pure-f32 reference -> loose tolerance
    max_diff = float(jnp.max(jnp.abs(out - ref)))
    assert jnp.allclose(out, ref, atol=5e-2, rtol=5e-2), f"mismatch vs reference (max diff {max_diff})"

    print("KERNEL_OK")
</pallas_src>

<mosaic_0001>
module attributes {stable_mosaic.version = 11 : i64} {
  func.func @encode_kernel(%arg0: i32, %arg1: memref<1xf32, #tpu.memory_space<smem>>, %arg2: memref<8x128xf32, #tpu.memory_space<vmem>>, %arg3: memref<8x1xf32, #tpu.memory_space<vmem>>, %arg4: memref<128x128xbf16, #tpu.memory_space<vmem>>, %arg5: memref<8x128xbf16, #tpu.memory_space<vmem>>) attributes {dimension_semantics = [#tpu.dimension_semantics<parallel>], iteration_bounds = array<i64: 1>, scalar_prefetch = 0 : i64, scratch_operands = 0 : i64, tpu.core_type = #tpu.core_type<tc>, window_params = [{transform_indices = @transform_0, window_bounds = array<i64: 1>}, {transform_indices = @transform_1, window_bounds = array<i64: 8, 128>}, {transform_indices = @transform_2, window_bounds = array<i64: 8, 1>}, {pipeline_mode = #tpu.pipeline_mode<synchronous>, transform_indices = @transform_3, window_bounds = array<i64: 128, 128>}, {transform_indices = @transform_4, window_bounds = array<i64: 8, 128>}]} {
    %c0 = arith.constant 0 : index
    %0 = memref.load %arg1[%c0] : memref<1xf32, #tpu.memory_space<smem>>
    %c0_0 = arith.constant 0 : index
    %c0_1 = arith.constant 0 : index
    %1 = vector.load %arg2[%c0_0, %c0_1] : memref<8x128xf32, #tpu.memory_space<vmem>>, vector<8x128xf32>
    %cst = arith.constant 0.000000e+00 : f32
    %2 = vector.broadcast %cst : f32 to vector<8x128xf32>
    %3 = arith.cmpf oge, %1, %2 : vector<8x128xf32>
    %4 = vector.broadcast %0 : f32 to vector<8x128xf32>
    %5 = arith.mulf %4, %1 : vector<8x128xf32>
    %6 = arith.select %3, %1, %5 : vector<8x128xi1>, vector<8x128xf32>
    %7 = arith.truncf %6 : vector<8x128xf32> to vector<8x128xbf16>
    %c0_2 = arith.constant 0 : index
    %c0_3 = arith.constant 0 : index
    %8 = vector.load %arg4[%c0_2, %c0_3] : memref<128x128xbf16, #tpu.memory_space<vmem>>, vector<128x128xbf16>
    %cst_4 = arith.constant dense<0.000000e+00> : vector<8x128xf32>
    %9 = tpu.matmul %7, %8, %cst_4 {dimension_numbers = #tpu.dot_dimension_numbers<[1], [0], [0], [1], [0, 0, 1, 1], [], []>} : vector<8x128xbf16>, vector<128x128xbf16>, vector<8x128xf32> -> vector<8x128xf32>
    %c0_5 = arith.constant 0 : index
    %c0_6 = arith.constant 0 : index
    %10 = vector.load %arg3[%c0_5, %c0_6] : memref<8x1xf32, #tpu.memory_space<vmem>>, vector<8x1xf32>
    %cst_7 = arith.constant 0.000000e+00 : f32
    %11 = vector.broadcast %cst_7 : f32 to vector<8x1xf32>
    %12 = arith.cmpf ogt, %10, %11 : vector<8x1xf32>
    %cst_8 = arith.constant 0.000000e+00 : f32
    %13 = vector.shape_cast %12 : vector<8x1xi1> to vector<8x1xi1>
    %14 = vector.broadcast %13 : vector<8x1xi1> to vector<8x128xi1>
    %15 = vector.broadcast %cst_8 : f32 to vector<8x128xf32>
    %16 = arith.select %14, %9, %15 : vector<8x128xi1>, vector<8x128xf32>
    %17 = arith.truncf %16 : vector<8x128xf32> to vector<8x128xbf16>
    %c0_9 = arith.constant 0 : index
    %c0_10 = arith.constant 0 : index
    %18 = vector.load %arg5[%c0_9, %c0_10] : memref<8x128xbf16, #tpu.memory_space<vmem>>, vector<8x128xbf16>
    tpu.vector_store %arg5[%c0_9, %c0_10], %17 {strides = array<i32>} : memref<8x128xbf16, #tpu.memory_space<vmem>>, vector<8x128xbf16>,
    return
  }
  func.func @transform_0(%arg0: i32) -> i32 {
    %c0_i32 = arith.constant 0 : i32
    %c0_i32_0 = arith.constant 0 : i32
    return %c0_i32 : i32
  }
  func.func @transform_1(%arg0: i32) -> (i32, i32) {
    %c0_i32 = arith.constant 0 : i32
    %c0_i32_0 = arith.constant 0 : i32
    return %arg0, %c0_i32 : i32, i32
  }
  func.func @transform_2(%arg0: i32) -> (i32, i32) {
    %c0_i32 = arith.constant 0 : i32
    %c0_i32_0 = arith.constant 0 : i32
    return %arg0, %c0_i32 : i32, i32
  }
  func.func @transform_3(%arg0: i32) -> (i32, i32) {
    %c0_i32 = arith.constant 0 : i32
    %c0_i32_0 = arith.constant 0 : i32
    %c0_i32_1 = arith.constant 0 : i32
    return %c0_i32, %c0_i32_0 : i32, i32
  }
  func.func @transform_4(%arg0: i32) -> (i32, i32) {
    %c0_i32 = arith.constant 0 : i32
    %c0_i32_0 = arith.constant 0 : i32
    return %arg0, %c0_i32 : i32, i32
  }
}

</mosaic_0001>

<llo_original>
// kernel: tpu_custom_call.1
$region0: #{tpu_custom_call.1}
  #allocation0 [shape = 'u32[]', space=smem, size = 0x4, offset = 0x4, fixed_abs, tag = 'smem constant byte address 0x4 - core index']
  #allocation1 [shape = 'u32[72,128]{1,0:T(1,128)}', space=vmem, size = 0x9000, scoped, tag = 'internal scratch']
  #allocation2 [shape = 'f32[1]{0:T(128)S(6)}', space=smem, size = 0x200, scoped, tag = 'scoped memory for tpu_custom_call.1']
  %s0 = inlined_call_operand.<no memory space> [shape: f32[1], index: 0, kind: input, shape index: {}]
  %s1 = inlined_call_operand.vmem [shape: f32[8,128], index: 1, kind: input, shape index: {}]
  %s2 = inlined_call_operand.vmem [shape: f32[8,1], index: 2, kind: input, shape index: {}]
  %s3 = inlined_call_operand.hbm [shape: bf16[128,128], index: 3, kind: input, shape index: {}]
  %s4 = inlined_call_operand.hbm [shape: bf16[8,128], index: 4, kind: output, shape index: {}]
  %s5 = sld [smem:[#allocation0]]
  $region30: #{tpu_custom_call.1} parent=0
    _
  %s7 = ssub.s32 1, %s5
  %s8 = scalar_select 0, %s7, %s5
  %9 = sst [smem:[#allocation2]] %s0
  $region1: #{tpu_custom_call.1} parent=0
    #allocation3 [shape = 'u8[32768]{0}', space=vmem, size = 0x8000, scoped, tag = 'input window, operand 3, single buffered']
    #allocation4 [shape = 's32[1]{0}', space=sflag, size = 0x4, scoped, tag = 'scoped memory for tpu_custom_call.1']
    #allocation5 [shape = 's32[1]{0}', space=sflag, size = 0x4, scoped, tag = 'scoped memory for tpu_custom_call.1']
    #allocation6 [shape = 'u8[2048]{0}', space=vmem, size = 0x800, scoped, tag = 'output window, operand 0, single buffered']
    %10 = vsyncpa [#allocation4], 0
    %11 = vsyncpa [#allocation5], 0
    // Predicated region
    $region2: #{tpu_custom_call.1} parent=1 // pred_check
      _
    $region3: #{tpu_custom_call.1} parent=1 // pred_check_branch
      %13 = sbr.rel (0) target = $region5
    $region4: #{tpu_custom_call.1} parent=1 // pred_region
      _
    $region5: #{tpu_custom_call.1} parent=1 // pred_fallthru
      _
    // Predicated region
    $region6: #{tpu_custom_call.1} parent=1 // pred_check
      _
    $region7: #{tpu_custom_call.1} parent=1 // pred_check_branch
      %15 = sbr.rel (0) target = $region9
    $region8: #{tpu_custom_call.1} parent=1 // pred_region
      _
    $region9: #{tpu_custom_call.1} parent=1 // pred_fallthru
      _
    // Predicated region
    $region10: #{tpu_custom_call.1} parent=1 // pred_check
      _
    $region11: #{tpu_custom_call.1} parent=1 // pred_check_branch
      %17 = sbr.rel (0) target = $region13
    $region12: #{tpu_custom_call.1} parent=1 // pred_region
      _
    $region13: #{tpu_custom_call.1} parent=1 // pred_fallthru
      _
    // Predicated region
    $region14: #{tpu_custom_call.1} parent=1 // pred_check
      _
    $region15: #{tpu_custom_call.1} parent=1 // pred_check_branch
      %19 = sbr.rel (0) target = $region17
    $region16: #{tpu_custom_call.1} parent=1 // pred_region
      %21 = vsyncadd [#allocation4], 0
      %s22 = sshll.u32 %s3, 4
      %s23 = int_to_ptr.hbm [resolvable:$true] %s22
      %s24 = sshll.u32 [#allocation3], 4
      %s25 = int_to_ptr.vmem [resolvable:$true] %s24
      %30 = dma.hbm_to_vmem [thread:$0]  %s23, 1024, %s25, [#allocation4], 64, 64, 4
    $region17: #{tpu_custom_call.1} parent=1 // pred_fallthru
      _
    // Predicated region
    $region18: #{tpu_custom_call.1} parent=1 // pred_check
      _
    $region19: #{tpu_custom_call.1} parent=1 // pred_check_branch
      %32 = sbr.rel (0) target = $region21
    $region20: #{tpu_custom_call.1} parent=1 // pred_region
      %34 = dma.done [#allocation4], 1024
    $region21: #{tpu_custom_call.1} parent=1 // pred_fallthru
      _
    %s35 = sld [smem:[#allocation2]]
    %v36 = vld [vmem:[%s1] sm:$0xff]
    %vm37 = vcmp.ge.f32.partialorder %v36, 0.0
    %v38 = vstv %s35
    %v39 = vmul.f32 %v38, %v36
    %v40 = vsel %vm37, %v36, %v39
    %v41 = vpack.c.bf16 %v40, %v40
    %v42 = vld [vmem:[#allocation3] sm:$0xf]
    %v43 = vld [vmem:[#allocation3 + $0x4] sm:$0xf]
    %v44 = vld [vmem:[#allocation3 + $0x8] sm:$0xf]
    %v45 = vld [vmem:[#allocation3 + $0xc] sm:$0xf]
    %v46 = vld [vmem:[#allocation3 + $0x10] sm:$0xf]
    %v47 = vld [vmem:[#allocation3 + $0x14] sm:$0xf]
    %v48 = vld [vmem:[#allocation3 + $0x18] sm:$0xf]
    %v49 = vld [vmem:[#allocation3 + $0x1c] sm:$0xf]
    %v50 = vld [vmem:[#allocation3 + $0x20] sm:$0xf]
    %v51 = vld [vmem:[#allocation3 + $0x24] sm:$0xf]
    %v52 = vld [vmem:[#allocation3 + $0x28] sm:$0xf]
    %v53 = vld [vmem:[#allocation3 + $0x2c] sm:$0xf]
    %v54 = vld [vmem:[#allocation3 + $0x30] sm:$0xf]
    %v55 = vld [vmem:[#allocation3 + $0x34] sm:$0xf]
    %v56 = vld [vmem:[#allocation3 + $0x38] sm:$0xf]
    %v57 = vld [vmem:[#allocation3 + $0x3c] sm:$0xf]
    %v74 = vunpack.c.l.b16 %v42
    %v75 = vunpack.c.l.b16 %v43
    %v76 = vunpack.c.l.b16 %v44
    %v77 = vunpack.c.l.b16 %v45
    %v78 = vunpack.c.l.b16 %v46
    %v79 = vunpack.c.l.b16 %v47
    %v80 = vunpack.c.l.b16 %v48
    %v81 = vunpack.c.l.b16 %v49
    %v82 = vunpack.c.l.b16 %v50
    %v83 = vunpack.c.l.b16 %v51
    %v84 = vunpack.c.l.b16 %v52
    %v85 = vunpack.c.l.b16 %v53
    %v86 = vunpack.c.l.b16 %v54
    %v87 = vunpack.c.l.b16 %v55
    %v88 = vunpack.c.l.b16 %v56
    %v89 = vunpack.c.l.b16 %v57
    %v90 = vpack.c.b16 %v75, %v74
    %v91 = vpack.c.b16 %v77, %v76
    %v92 = vpack.c.b16 %v79, %v78
    %v93 = vpack.c.b16 %v81, %v80
    %v94 = vpack.c.b16 %v83, %v82
    %v95 = vpack.c.b16 %v85, %v84
    %v96 = vpack.c.b16 %v87, %v86
    %v97 = vpack.c.b16 %v89, %v88
    %106 = vmatpush.bf16.msra.mxu0 %v97
    %107 = vmatpush.bf16.msra.mxu0 %v96
    %108 = vmatpush.bf16.msra.mxu0 %v95
    %109 = vmatpush.bf16.msra.mxu0 %v94
    %110 = vmatpush.bf16.msra.mxu0 %v93
    %111 = vmatpush.bf16.msra.mxu0 %v92
    %112 = vmatpush.bf16.msra.mxu0 %v91
    %113 = vmatpush.bf16.msra.mxu0 %v90
    %114 = vmatmul.bf16.gmra.mxu0 %v41
    %v115 = vpop.f32.mrf.mxu0
    %v116 = vadd.f32 0.0, %v115
    %v117 = vpop.f32.mrf.mxu0
    %118 = vdwg.mxu0
    %v119 = vld [vmem:[%s2] sm:$0xff]
    %vm120 = vcmp.gt.f32.partialorder %v119, 0.0
    %v121 = vsel %vm120, 1, 0
    %122 = vset.pattern.permute.xlu0 0
    %123 = vperm.xlu0 %122, %v121
    %v124 = vpop.permute.xlu0 %123
    %vm125 = vcmp.eq.s32.totalorder %v124, 1
    %v126 = vsel %vm125, %v116, 0.0
    %v127 = vpack.c.bf16 %v126, %v126
    %128 = vst [vmem:[#allocation6] sm:$0xf] %v127
    // Predicated region
    $region22: #{tpu_custom_call.1} parent=1 // pred_check
      _
    $region23: #{tpu_custom_call.1} parent=1 // pred_check_branch
      %130 = sbr.rel (0) target = $region25
    $region24: #{tpu_custom_call.1} parent=1 // pred_region
      %132 = vsyncadd [#allocation5], 0
      %s134 = sshll.u32 [#allocation6], 4
      %s135 = int_to_ptr.vmem [resolvable:$true] %s134
      %s136 = sshll.u32 %s4, 4
      %s137 = int_to_ptr.hbm [resolvable:$true] %s136
      %139 = dma.vmem_to_hbm [thread:$0]  %s135, 64, %s137, [#allocation5]
    $region25: #{tpu_custom_call.1} parent=1 // pred_fallthru
      _
    // Predicated region
    $region26: #{tpu_custom_call.1} parent=1 // pred_check
      _
    $region27: #{tpu_custom_call.1} parent=1 // pred_check_branch
      %141 = sbr.rel (0) target = $region29
    $region28: #{tpu_custom_call.1} parent=1 // pred_region
      %143 = dma.done [#allocation5], 64
    $region29: #{tpu_custom_call.1} parent=1 // pred_fallthru
      _
    %144 = vsyncpa [#allocation4], 1
    %145 = vsyncpa [#allocation5], 1

</llo_original>
